<compile_context>
chip_gen: v6e
topology: v6e:2x2x1
jax: 0.10.0
libtpu: 0.0.40
codegen_flags: <defaults>
</compile_context>

<pallas_src>
import jax
import jax.numpy as jnp
from jax.experimental import pallas as pl
from jax.experimental.pallas import tpu as pltpu

BN_EPS = 1e-5
LEAKY_SLOPE = 0.01     # nn.LeakyReLU() default
NOUT = 2               # number of classes
NOUT_PAD = 128         # lane-padded width for the output-layer matmul (in-kernel only)


def _leaky(x):
    return jnp.where(x > 0, x, LEAKY_SLOPE * x)


def _round_up(a, b):
    return (a + b - 1) // b * b


# ---------------------------------------------------------------------------
# Kernel
# ---------------------------------------------------------------------------
def class_model_kernel(x_ref, bn0_ref, w1_ref, w2_ref, w3_ref, bias_ref,
                       ls_ref, logits_ref):
    # TODO(synk): Dropout is eval-mode identity here (training-mode RNG dropout not modeled).
    hid = w1_ref.shape[1]

    x = x_ref[...]                                        # (TM, dim) f32

    # ---- initial BatchNorm1d folded into one scale/shift pair ----
    xn = x * bn0_ref[0:1, :] + bn0_ref[1:2, :]

    # ---- LogSoftmax(dim=-1) over the BN'd features (first module output) ----
    m = jnp.max(xn, axis=-1, keepdims=True)
    z = xn - m
    lse = jnp.log(jnp.sum(jnp.exp(z), axis=-1, keepdims=True))
    ls_ref[...] = (z - lse).astype(ls_ref.dtype)

    # ---- MLP: (Linear + folded BN) -> LeakyReLU, x2, then output Linear ----
    b1 = bias_ref[0:1, :hid]
    b2 = bias_ref[1:2, :hid]
    b3 = bias_ref[2:3, :NOUT_PAD]

    h = jnp.dot(xn.astype(jnp.bfloat16), w1_ref[...],
                preferred_element_type=jnp.float32) + b1
    h = _leaky(h)
    h = jnp.dot(h.astype(jnp.bfloat16), w2_ref[...],
                preferred_element_type=jnp.float32) + b2
    h = _leaky(h)
    logits = jnp.dot(h.astype(jnp.bfloat16), w3_ref[...],
                     preferred_element_type=jnp.float32) + b3
    # Only the first NOUT lanes are real; write a narrow (TM, NOUT) block so the HBM
    # writeback carries no padding (kernel is HBM-bound, not store-slot bound).
    logits_ref[...] = logits[:, :NOUT].astype(logits_ref.dtype)


# ---------------------------------------------------------------------------
# One-time parameter preparation: BN folding + packing (done outside the kernel)
# ---------------------------------------------------------------------------
def prepare_params(p):
    f32 = jnp.float32

    # initial BN -> scale/shift: bn(x) = x*s0 + t0
    s0 = p["bn_g"] * jax.lax.rsqrt(p["bn_v"] + BN_EPS)            # (1, dim)
    t0 = p["bn_b"] - p["bn_m"] * s0                               # (1, dim)
    bn0 = jnp.concatenate([s0, t0], axis=0).astype(f32)           # (2, dim)

    # hidden BN folding: bn(x@w + b) = x@(w*s) + (b - m)*s + beta
    s1 = p["g1"] * jax.lax.rsqrt(p["v1"] + BN_EPS)                # (1, hid)
    w1 = (p["w1"] * s1).astype(jnp.bfloat16)                      # (dim, hid)
    b1 = ((p["b1"] - p["m1"]) * s1 + p["be1"]).astype(f32)        # (1, hid)

    s2 = p["g2"] * jax.lax.rsqrt(p["v2"] + BN_EPS)
    w2 = (p["w2"] * s2).astype(jnp.bfloat16)                      # (hid, hid)
    b2 = ((p["b2"] - p["m2"]) * s2 + p["be2"]).astype(f32)        # (1, hid)

    # output layer padded to a lane-dense 128-wide tile for the MXU
    hid = p["w1"].shape[1]
    w3 = jnp.zeros((hid, NOUT_PAD), f32).at[:, :NOUT].set(p["w3"]).astype(jnp.bfloat16)
    b3 = jnp.zeros((1, NOUT_PAD), f32).at[:, :NOUT].set(p["b3"])

    # pack the three bias rows into one array
    bw = max(hid, NOUT_PAD)
    bias = jnp.zeros((3, bw), f32)
    bias = bias.at[0, :hid].set(b1[0])
    bias = bias.at[1, :hid].set(b2[0])
    bias = bias.at[2, :NOUT_PAD].set(b3[0])

    return {"bn0": bn0, "w1": w1, "w2": w2, "w3": w3, "bias": bias}


# ---------------------------------------------------------------------------
# Wrapper
# ---------------------------------------------------------------------------
def _pick_tm(n):
    """Row tile: large (up to 1024 rows) to amortize per-grid-step overhead, but
    capped so the grid has >= 2 parallel steps when possible (v7x has 2 TCs)."""
    if n <= 8:
        return 8
    return max(8, min(1024, _round_up((n + 1) // 2, 8)))


def class_model_forward(x, packed):
    """x: [N, dim] float32; packed: output of prepare_params.
    Returns (log_softmax(bn(x)), logits)."""
    n, dim = x.shape
    hid = packed["w1"].shape[1]
    bw = packed["bias"].shape[1]

    tm = _pick_tm(n)
    grid = (pl.cdiv(n, tm),)   # ragged last block; no wrapper-side jnp.pad / extra HBM pass

    flops = 2 * n * (dim * hid + hid * hid + hid * NOUT_PAD)
    bytes_accessed = (
        n * dim * 4                           # x in
        + packed["bn0"].size * 4
        + packed["w1"].size * 2 + packed["w2"].size * 2 + packed["w3"].size * 2
        + packed["bias"].size * 4
        + n * dim * 4                         # log-softmax out
        + n * NOUT * 4                        # narrow logits out
    )
    cost = pl.CostEstimate(flops=int(flops),
                           transcendentals=int(n * (dim + 1)),   # exp per elem + log per row
                           bytes_accessed=int(bytes_accessed))

    ls, logits = pl.pallas_call(
        class_model_kernel,
        out_shape=(
            jax.ShapeDtypeStruct((n, dim), jnp.float32),     # LogSoftmax(bn(x))
            jax.ShapeDtypeStruct((n, NOUT), jnp.float32),    # logits, no padding
        ),
        grid=grid,
        in_specs=[
            pl.BlockSpec((tm, dim), lambda i: (i, 0)),        # x: row-tiled (ragged last)
            pl.BlockSpec((2, dim), lambda i: (0, 0)),         # folded initial BN (resident)
            pl.BlockSpec((dim, hid), lambda i: (0, 0)),       # w1 (bf16, BN folded, resident)
            pl.BlockSpec((hid, hid), lambda i: (0, 0)),       # w2 (bf16, BN folded, resident)
            pl.BlockSpec((hid, NOUT_PAD), lambda i: (0, 0)),  # w3 (bf16, lane-padded, resident)
            pl.BlockSpec((3, bw), lambda i: (0, 0)),          # packed biases (resident)
        ],
        out_specs=(
            pl.BlockSpec((tm, dim), lambda i: (i, 0)),
            pl.BlockSpec((tm, NOUT), lambda i: (i, 0)),
        ),
        compiler_params=pltpu.CompilerParams(
            dimension_semantics=("parallel",)),
        cost_estimate=cost,
    )(x, packed["bn0"], packed["w1"], packed["w2"], packed["w3"], packed["bias"])

    return ls, logits


# ---------------------------------------------------------------------------
# Test harness
# ---------------------------------------------------------------------------
def _make_params(key, dim, hid):
    """Deterministic synthetic parameters (module __init__ shapes)."""
    ks = jax.random.split(key, 20)
    f32 = jnp.float32

    def norm(k, shape, scale):
        return (scale * jax.random.normal(k, shape)).astype(f32)

    return {
        # initial BatchNorm1d(dim)
        "bn_g": 1.0 + 0.1 * jax.random.normal(ks[0], (1, dim)).astype(f32),
        "bn_b": norm(ks[1], (1, dim), 0.1),
        "bn_m": norm(ks[2], (1, dim), 0.1),
        "bn_v": (1.0 + 0.1 * jax.random.uniform(ks[3], (1, dim))).astype(f32),
        # MLP hidden layer 1: Linear(dim, hid) + BN(hid)
        "w1": norm(ks[4], (dim, hid), 1.0 / jnp.sqrt(dim)),
        "b1": norm(ks[5], (1, hid), 0.05),
        "g1": 1.0 + 0.1 * jax.random.normal(ks[6], (1, hid)).astype(f32),
        "be1": norm(ks[7], (1, hid), 0.05),
        "m1": norm(ks[8], (1, hid), 0.05),
        "v1": (1.0 + 0.1 * jax.random.uniform(ks[9], (1, hid))).astype(f32),
        # MLP hidden layer 2: Linear(hid, hid) + BN(hid)
        "w2": norm(ks[10], (hid, hid), 1.0 / jnp.sqrt(hid)),
        "b2": norm(ks[11], (1, hid), 0.05),
        "g2": 1.0 + 0.1 * jax.random.normal(ks[12], (1, hid)).astype(f32),
        "be2": norm(ks[13], (1, hid), 0.05),
        "m2": norm(ks[16], (1, hid), 0.05),
        "v2": (1.0 + 0.1 * jax.random.uniform(ks[17], (1, hid))).astype(f32),
        # output layer: Linear(hid, 2)
        "w3": norm(ks[14], (hid, NOUT), 1.0 / jnp.sqrt(hid)),
        "b3": norm(ks[15], (1, NOUT), 0.05),
    }


def _reference_folded(x, packed):
    """Pure-JAX twin of the kernel computation (same folded params, same bf16 casts)."""
    bn0 = packed["bn0"]
    hid = packed["w1"].shape[1]
    xn = x * bn0[0:1, :] + bn0[1:2, :]
    ls = jax.nn.log_softmax(xn, axis=-1)
    b1 = packed["bias"][0:1, :hid]
    b2 = packed["bias"][1:2, :hid]
    b3 = packed["bias"][2:3, :NOUT_PAD]
    h = _leaky(jnp.dot(xn.astype(jnp.bfloat16), packed["w1"],
                       preferred_element_type=jnp.float32) + b1)
    h = _leaky(jnp.dot(h.astype(jnp.bfloat16), packed["w2"],
                       preferred_element_type=jnp.float32) + b2)
    logits = jnp.dot(h.astype(jnp.bfloat16), packed["w3"],
                     preferred_element_type=jnp.float32) + b3
    return ls, logits[:, :NOUT]


def _reference_f32(x, p):
    """Unfolded f32 reference of the original module semantics (eval mode)."""
    def bn(v, g, b, m, var):
        return (v - m) * jax.lax.rsqrt(var + BN_EPS) * g + b
    xn = bn(x, p["bn_g"], p["bn_b"], p["bn_m"], p["bn_v"])
    ls = jax.nn.log_softmax(xn, axis=-1)
    h = _leaky(bn(xn @ p["w1"] + p["b1"], p["g1"], p["be1"], p["m1"], p["v1"]))
    h = _leaky(bn(h @ p["w2"] + p["b2"], p["g2"], p["be2"], p["m2"], p["v2"]))
    logits = h @ p["w3"] + p["b3"]
    return ls, logits


def _check(x, raw, packed):
    ls, logits = class_model_forward(x, packed)
    jax.block_until_ready((ls, logits))
    n = x.shape[0]
    assert ls.shape == (n, x.shape[1]) and logits.shape == (n, NOUT)

    # exact-path check against the pure-JAX twin of the kernel math
    ls_ref, logits_ref = _reference_folded(x, packed)
    assert jnp.allclose(ls, ls_ref, atol=1e-4, rtol=1e-4)
    assert jnp.allclose(logits, logits_ref, atol=2e-3, rtol=2e-3)

    # semantic check against the unfolded f32 module reference (looser: bf16 matmuls)
    ls_f32, logits_f32 = _reference_f32(x, raw)
    assert jnp.allclose(ls, ls_f32, atol=1e-4, rtol=1e-4)
    assert jnp.allclose(logits, logits_f32, atol=5e-2, rtol=5e-2)


if __name__ == "__main__":
    # params.feat_root='ecapa' -> 256; context=0 -> dim = 256; 'seq' not in feat_root -> rnn=None
    # TODO(synk): bidirectional-GRU branch ('seq' in feat_root) not implemented — not taken for this config.
    dim = 256            # ecapa, context=0
    hid = 128            # params.class_hidden
    batch = 8

    key = jax.random.PRNGKey(0)
    kx, kp, kx2 = jax.random.split(key, 3)
    raw = _make_params(kp, dim, hid)
    packed = prepare_params(raw)

    # small single-block case
    x = jax.random.normal(kx, (batch, dim), dtype=jnp.float32)
    _check(x, raw, packed)

    # multi-step grid with a ragged last block (exercises masked writeback path)
    x2 = jax.random.normal(kx2, (300, dim), dtype=jnp.float32)
    _check(x2, raw, packed)

    print("KERNEL_OK")
</pallas_src>

<mosaic_0001>
module attributes {stable_mosaic.version = 11 : i64} {
  func.func @class_model_kernel(%arg0: i32, %arg1: memref<8x256xf32, #tpu.memory_space<vmem>>, %arg2: memref<2x256xf32, #tpu.memory_space<vmem>>, %arg3: memref<256x128xbf16, #tpu.memory_space<vmem>>, %arg4: memref<128x128xbf16, #tpu.memory_space<vmem>>, %arg5: memref<128x128xbf16, #tpu.memory_space<vmem>>, %arg6: memref<3x128xf32, #tpu.memory_space<vmem>>, %arg7: memref<8x256xf32, #tpu.memory_space<vmem>>, %arg8: memref<8x2xf32, #tpu.memory_space<vmem>>) attributes {dimension_semantics = [#tpu.dimension_semantics<parallel>], iteration_bounds = array<i64: 1>, scalar_prefetch = 0 : i64, scratch_operands = 0 : i64, tpu.core_type = #tpu.core_type<tc>, window_params = [{transform_indices = @transform_0, window_bounds = array<i64: 8, 256>}, {pipeline_mode = #tpu.pipeline_mode<synchronous>, transform_indices = @transform_1, window_bounds = array<i64: 2, 256>}, {pipeline_mode = #tpu.pipeline_mode<synchronous>, transform_indices = @transform_2, window_bounds = array<i64: 256, 128>}, {pipeline_mode = #tpu.pipeline_mode<synchronous>, transform_indices = @transform_3, window_bounds = array<i64: 128, 128>}, {pipeline_mode = #tpu.pipeline_mode<synchronous>, transform_indices = @transform_4, window_bounds = array<i64: 128, 128>}, {pipeline_mode = #tpu.pipeline_mode<synchronous>, transform_indices = @transform_5, window_bounds = array<i64: 3, 128>}, {transform_indices = @transform_6, window_bounds = array<i64: 8, 256>}, {transform_indices = @transform_7, window_bounds = array<i64: 8, 2>}]} {
    %c0 = arith.constant 0 : index
    %c0_0 = arith.constant 0 : index
    %0 = vector.load %arg1[%c0, %c0_0] : memref<8x256xf32, #tpu.memory_space<vmem>>, vector<8x256xf32>
    %c0_1 = arith.constant 0 : index
    %c0_2 = arith.constant 0 : index
    %1 = vector.load %arg2[%c0_1, %c0_2] : memref<2x256xf32, #tpu.memory_space<vmem>>, vector<1x256xf32>
    %2 = vector.broadcast %1 : vector<1x256xf32> to vector<8x256xf32>
    %3 = arith.mulf %0, %2 : vector<8x256xf32>
    %c1 = arith.constant 1 : index
    %c0_3 = arith.constant 0 : index
    %4 = vector.load %arg2[%c1, %c0_3] : memref<2x256xf32, #tpu.memory_space<vmem>>, vector<1x256xf32>
    %5 = vector.broadcast %4 : vector<1x256xf32> to vector<8x256xf32>
    %6 = arith.addf %3, %5 : vector<8x256xf32>
    %cst = arith.constant dense<0xFF800000> : vector<8xf32>
    %7 = vector.multi_reduction <maximumf>, %6, %cst [1] : vector<8x256xf32> to vector<8xf32>
    %8 = vector.shape_cast %7 : vector<8xf32> to vector<8x1xf32>
    %9 = vector.broadcast %8 : vector<8x1xf32> to vector<8x256xf32>
    %10 = arith.subf %6, %9 : vector<8x256xf32>
    %11 = math.exp %10 : vector<8x256xf32>
    %cst_4 = arith.constant dense<0.000000e+00> : vector<8xf32>
    %12 = vector.multi_reduction <add>, %11, %cst_4 [1] : vector<8x256xf32> to vector<8xf32>
    %13 = vector.shape_cast %12 : vector<8xf32> to vector<8x1xf32>
    %14 = math.log %13 : vector<8x1xf32>
    %15 = vector.broadcast %14 : vector<8x1xf32> to vector<8x256xf32>
    %16 = arith.subf %10, %15 : vector<8x256xf32>
    %c0_5 = arith.constant 0 : index
    %c0_6 = arith.constant 0 : index
    %17 = vector.load %arg7[%c0_5, %c0_6] : memref<8x256xf32, #tpu.memory_space<vmem>>, vector<8x256xf32>
    tpu.vector_store %arg7[%c0_5, %c0_6], %16 {strides = array<i32>} : memref<8x256xf32, #tpu.memory_space<vmem>>, vector<8x256xf32>,
    %c0_7 = arith.constant 0 : index
    %c0_8 = arith.constant 0 : index
    %18 = vector.load %arg6[%c0_7, %c0_8] : memref<3x128xf32, #tpu.memory_space<vmem>>, vector<1x128xf32>
    %c1_9 = arith.constant 1 : index
    %c0_10 = arith.constant 0 : index
    %19 = vector.load %arg6[%c1_9, %c0_10] : memref<3x128xf32, #tpu.memory_space<vmem>>, vector<1x128xf32>
    %c2 = arith.constant 2 : index
    %c0_11 = arith.constant 0 : index
    %20 = vector.load %arg6[%c2, %c0_11] : memref<3x128xf32, #tpu.memory_space<vmem>>, vector<1x128xf32>
    %21 = arith.truncf %6 : vector<8x256xf32> to vector<8x256xbf16>
    %c0_12 = arith.constant 0 : index
    %c0_13 = arith.constant 0 : index
    %22 = vector.load %arg3[%c0_12, %c0_13] : memref<256x128xbf16, #tpu.memory_space<vmem>>, vector<256x128xbf16>
    %cst_14 = arith.constant dense<0.000000e+00> : vector<8x128xf32>
    %23 = tpu.matmul %21, %22, %cst_14 {dimension_numbers = #tpu.dot_dimension_numbers<[1], [0], [0], [1], [0, 0, 1, 1], [], []>} : vector<8x256xbf16>, vector<256x128xbf16>, vector<8x128xf32> -> vector<8x128xf32>
    %24 = vector.broadcast %18 : vector<1x128xf32> to vector<8x128xf32>
    %25 = arith.addf %23, %24 : vector<8x128xf32>
    %cst_15 = arith.constant 0.000000e+00 : f32
    %26 = vector.broadcast %cst_15 : f32 to vector<8x128xf32>
    %27 = arith.cmpf ogt, %25, %26 : vector<8x128xf32>
    %cst_16 = arith.constant 0.00999999977 : f32
    %28 = vector.broadcast %cst_16 : f32 to vector<8x128xf32>
    %29 = arith.mulf %28, %25 : vector<8x128xf32>
    %30 = arith.select %27, %25, %29 : vector<8x128xi1>, vector<8x128xf32>
    %31 = arith.truncf %30 : vector<8x128xf32> to vector<8x128xbf16>
    %c0_17 = arith.constant 0 : index
    %c0_18 = arith.constant 0 : index
    %32 = vector.load %arg4[%c0_17, %c0_18] : memref<128x128xbf16, #tpu.memory_space<vmem>>, vector<128x128xbf16>
    %cst_19 = arith.constant dense<0.000000e+00> : vector<8x128xf32>
    %33 = tpu.matmul %31, %32, %cst_19 {dimension_numbers = #tpu.dot_dimension_numbers<[1], [0], [0], [1], [0, 0, 1, 1], [], []>} : vector<8x128xbf16>, vector<128x128xbf16>, vector<8x128xf32> -> vector<8x128xf32>
    %34 = vector.broadcast %19 : vector<1x128xf32> to vector<8x128xf32>
    %35 = arith.addf %33, %34 : vector<8x128xf32>
    %cst_20 = arith.constant 0.000000e+00 : f32
    %36 = vector.broadcast %cst_20 : f32 to vector<8x128xf32>
    %37 = arith.cmpf ogt, %35, %36 : vector<8x128xf32>
    %cst_21 = arith.constant 0.00999999977 : f32
    %38 = vector.broadcast %cst_21 : f32 to vector<8x128xf32>
    %39 = arith.mulf %38, %35 : vector<8x128xf32>
    %40 = arith.select %37, %35, %39 : vector<8x128xi1>, vector<8x128xf32>
    %41 = arith.truncf %40 : vector<8x128xf32> to vector<8x128xbf16>
    %c0_22 = arith.constant 0 : index
    %c0_23 = arith.constant 0 : index
    %42 = vector.load %arg5[%c0_22, %c0_23] : memref<128x128xbf16, #tpu.memory_space<vmem>>, vector<128x128xbf16>
    %cst_24 = arith.constant dense<0.000000e+00> : vector<8x128xf32>
    %43 = tpu.matmul %41, %42, %cst_24 {dimension_numbers = #tpu.dot_dimension_numbers<[1], [0], [0], [1], [0, 0, 1, 1], [], []>} : vector<8x128xbf16>, vector<128x128xbf16>, vector<8x128xf32> -> vector<8x128xf32>
    %44 = vector.broadcast %20 : vector<1x128xf32> to vector<8x128xf32>
    %45 = arith.addf %43, %44 : vector<8x128xf32>
    %46 = vector.extract_strided_slice %45 {offsets = [0, 0], sizes = [8, 2], strides = [1, 1]} : vector<8x128xf32> to vector<8x2xf32>
    %c0_25 = arith.constant 0 : index
    %c0_26 = arith.constant 0 : index
    %47 = vector.load %arg8[%c0_25, %c0_26] : memref<8x2xf32, #tpu.memory_space<vmem>>, vector<8x2xf32>
    tpu.vector_store %arg8[%c0_25, %c0_26], %46 {strides = array<i32>} : memref<8x2xf32, #tpu.memory_space<vmem>>, vector<8x2xf32>,
    return
  }
  func.func @transform_0(%arg0: i32) -> (i32, i32) {
    %c0_i32 = arith.constant 0 : i32
    %c0_i32_0 = arith.constant 0 : i32
    return %arg0, %c0_i32 : i32, i32
  }
  func.func @transform_1(%arg0: i32) -> (i32, i32) {
    %c0_i32 = arith.constant 0 : i32
    %c0_i32_0 = arith.constant 0 : i32
    %c0_i32_1 = arith.constant 0 : i32
    return %c0_i32, %c0_i32_0 : i32, i32
  }
  func.func @transform_2(%arg0: i32) -> (i32, i32) {
    %c0_i32 = arith.constant 0 : i32
    %c0_i32_0 = arith.constant 0 : i32
    %c0_i32_1 = arith.constant 0 : i32
    return %c0_i32, %c0_i32_0 : i32, i32
  }
  func.func @transform_3(%arg0: i32) -> (i32, i32) {
    %c0_i32 = arith.constant 0 : i32
    %c0_i32_0 = arith.constant 0 : i32
    %c0_i32_1 = arith.constant 0 : i32
    return %c0_i32, %c0_i32_0 : i32, i32
  }
  func.func @transform_4(%arg0: i32) -> (i32, i32) {
    %c0_i32 = arith.constant 0 : i32
    %c0_i32_0 = arith.constant 0 : i32
    %c0_i32_1 = arith.constant 0 : i32
    return %c0_i32, %c0_i32_0 : i32, i32
  }
  func.func @transform_5(%arg0: i32) -> (i32, i32) {
    %c0_i32 = arith.constant 0 : i32
    %c0_i32_0 = arith.constant 0 : i32
    %c0_i32_1 = arith.constant 0 : i32
    return %c0_i32, %c0_i32_0 : i32, i32
  }
  func.func @transform_6(%arg0: i32) -> (i32, i32) {
    %c0_i32 = arith.constant 0 : i32
    %c0_i32_0 = arith.constant 0 : i32
    return %arg0, %c0_i32 : i32, i32
  }
  func.func @transform_7(%arg0: i32) -> (i32, i32) {
    %c0_i32 = arith.constant 0 : i32
    %c0_i32_0 = arith.constant 0 : i32
    return %arg0, %c0_i32 : i32, i32
  }
}

</mosaic_0001>

<llo_original>
// kernel: tpu_custom_call.1
$region0: #{tpu_custom_call.1}
  #allocation0 [shape = 'u32[]', space=smem, size = 0x4, offset = 0x4, fixed_abs, tag = 'smem constant byte address 0x4 - core index']
  #allocation1 [shape = 'u32[144,128]{1,0:T(1,128)}', space=vmem, size = 0x12000, scoped, tag = 'internal scratch']
  %s0 = inlined_call_operand.hbm [shape: f32[8,256], index: 0, kind: input, shape index: {}]
  %s1 = inlined_call_operand.hbm [shape: f32[2,256], index: 1, kind: input, shape index: {}]
  %s2 = inlined_call_operand.hbm [shape: bf16[256,128], index: 2, kind: input, shape index: {}]
  %s3 = inlined_call_operand.hbm [shape: bf16[128,128], index: 3, kind: input, shape index: {}]
  %s4 = inlined_call_operand.hbm [shape: bf16[128,128], index: 4, kind: input, shape index: {}]
  %s5 = inlined_call_operand.vmem [shape: f32[3,128], index: 5, kind: input, shape index: {}]
  %s6 = inlined_call_operand.hbm [shape: f32[8,256], index: 6, kind: output, shape index: {0}]
  %s7 = inlined_call_operand.vmem [shape: f32[8,2], index: 7, kind: output, shape index: {1}]
  %8 = xla_tuple %s6, %s7
  %s9 = sld [smem:[#allocation0]]
  $region62: #{tpu_custom_call.1} parent=0
    _
  %s11 = ssub.s32 1, %s9
  %s12 = scalar_select 0, %s11, %s9
  $region1: #{tpu_custom_call.1} parent=0
    #allocation2 [shape = 'u8[8192]{0}', space=vmem, size = 0x2000, scoped, tag = 'input window, operand 0, single buffered']
    #allocation3 [shape = 's32[1]{0}', space=sflag, size = 0x4, scoped, tag = 'scoped memory for tpu_custom_call.1']
    #allocation4 [shape = 's32[1]{0}', space=sflag, size = 0x4, scoped, tag = 'scoped memory for tpu_custom_call.1']
    #allocation5 [shape = 'u8[2048]{0}', space=vmem, size = 0x800, scoped, tag = 'input window, operand 1, single buffered']
    #allocation6 [shape = 's32[1]{0}', space=sflag, size = 0x4, scoped, tag = 'scoped memory for tpu_custom_call.1']
    #allocation7 [shape = 'u8[65536]{0}', space=vmem, size = 0x10000, scoped, tag = 'input window, operand 2, single buffered']
    #allocation8 [shape = 'u8[32768]{0}', space=vmem, size = 0x8000, scoped, tag = 'input window, operand 3, single buffered']
    #allocation9 [shape = 's32[1]{0}', space=sflag, size = 0x4, scoped, tag = 'scoped memory for tpu_custom_call.1']
    #allocation10 [shape = 'u8[32768]{0}', space=vmem, size = 0x8000, scoped, tag = 'input window, operand 4, single buffered']
    #allocation11 [shape = 'u8[8192]{0}', space=vmem, size = 0x2000, scoped, tag = 'output window, operand 0, single buffered']
    %13 = vsyncpa [#allocation3], 0
    %14 = vsyncpa [#allocation6], 0
    %15 = vsyncpa [#allocation9], 0
    %16 = vsyncpa [#allocation4], 0
    // Predicated region
    $region2: #{tpu_custom_call.1} parent=1 // pred_check
      _
    $region3: #{tpu_custom_call.1} parent=1 // pred_check_branch
      %18 = sbr.rel (0) target = $region5
    $region4: #{tpu_custom_call.1} parent=1 // pred_region
      %s20 = ssub.s32 256, 256
      %21 = vsyncadd [#allocation3], %s20
      %s23 = sshll.u32 [#allocation2], 4
      %s24 = int_to_ptr.vmem [resolvable:$true] %s23
      %26 = dma.hbm_to_vmem [thread:$0]  %s0, 256, %s24, [#allocation3]
    $region5: #{tpu_custom_call.1} parent=1 // pred_fallthru
      _
    // Predicated region
    $region6: #{tpu_custom_call.1} parent=1 // pred_check
      _
    $region7: #{tpu_custom_call.1} parent=1 // pred_check_branch
      %28 = sbr.rel (0) target = $region9
    $region8: #{tpu_custom_call.1} parent=1 // pred_region
      %s30 = ssub.s32 64, 64
      %31 = vsyncadd [#allocation6], %s30
      %s33 = sshll.u32 [#allocation5], 4
      %s34 = int_to_ptr.vmem [resolvable:$true] %s33
      %36 = dma.hbm_to_vmem [thread:$0]  %s1, 64, %s34, [#allocation6]
    $region9: #{tpu_custom_call.1} parent=1 // pred_fallthru
      _
    // Predicated region
    $region10: #{tpu_custom_call.1} parent=1 // pred_check
      _
    $region11: #{tpu_custom_call.1} parent=1 // pred_check_branch
      %38 = sbr.rel (0) target = $region13
    $region12: #{tpu_custom_call.1} parent=1 // pred_region
      %s40 = ssub.s32 2048, 2048
      %41 = vsyncadd [#allocation6], %s40
      %s42 = sshll.u32 [#allocation7], 4
      %s43 = int_to_ptr.vmem [resolvable:$true] %s42
      %48 = dma.hbm_to_vmem [thread:$0]  %s2, 2048, %s43, [#allocation6], 64, 64, 4
    $region13: #{tpu_custom_call.1} parent=1 // pred_fallthru
      _
    // Predicated region
    $region14: #{tpu_custom_call.1} parent=1 // pred_check
      _
    $region15: #{tpu_custom_call.1} parent=1 // pred_check_branch
      %50 = sbr.rel (0) target = $region17
    $region16: #{tpu_custom_call.1} parent=1 // pred_region
      %s52 = ssub.s32 1024, 1024
      %53 = vsyncadd [#allocation9], %s52
      %s54 = sshll.u32 [#allocation8], 4
      %s55 = int_to_ptr.vmem [resolvable:$true] %s54
      %60 = dma.hbm_to_vmem [thread:$0]  %s3, 1024, %s55, [#allocation9], 64, 64, 4
    $region17: #{tpu_custom_call.1} parent=1 // pred_fallthru
      _
    // Predicated region
    $region18: #{tpu_custom_call.1} parent=1 // pred_check
      _
    $region19: #{tpu_custom_call.1} parent=1 // pred_check_branch
      %62 = sbr.rel (0) target = $region21
    $region20: #{tpu_custom_call.1} parent=1 // pred_region
      %s64 = ssub.s32 1024, 1024
      %65 = vsyncadd [#allocation9], %s64
      %s66 = sshll.u32 [#allocation10], 4
      %s67 = int_to_ptr.vmem [resolvable:$true] %s66
      %72 = dma.hbm_to_vmem [thread:$0]  %s4, 1024, %s67, [#allocation9], 64, 64, 4
    $region21: #{tpu_custom_call.1} parent=1 // pred_fallthru
      _
    // Predicated region
    $region22: #{tpu_custom_call.1} parent=1 // pred_check
      _
    $region23: #{tpu_custom_call.1} parent=1 // pred_check_branch
      %74 = sbr.rel (0) target = $region25
    $region24: #{tpu_custom_call.1} parent=1 // pred_region
      _
    $region25: #{tpu_custom_call.1} parent=1 // pred_fallthru
      _
    // Predicated region
    $region26: #{tpu_custom_call.1} parent=1 // pred_check
      _
    $region27: #{tpu_custom_call.1} parent=1 // pred_check_branch
      %76 = sbr.rel (0) target = $region29
    $region28: #{tpu_custom_call.1} parent=1 // pred_region
      %77 = dma.done [#allocation3], 256
    $region29: #{tpu_custom_call.1} parent=1 // pred_fallthru
      _
    // Predicated region
    $region30: #{tpu_custom_call.1} parent=1 // pred_check
      _
    $region31: #{tpu_custom_call.1} parent=1 // pred_check_branch
      %79 = sbr.rel (0) target = $region33
    $region32: #{tpu_custom_call.1} parent=1 // pred_region
      %80 = dma.done [#allocation6], 64
    $region33: #{tpu_custom_call.1} parent=1 // pred_fallthru
      _
    // Predicated region
    $region34: #{tpu_custom_call.1} parent=1 // pred_check
      _
    $region35: #{tpu_custom_call.1} parent=1 // pred_check_branch
      %82 = sbr.rel (0) target = $region37
    $region36: #{tpu_custom_call.1} parent=1 // pred_region
      %83 = dma.done [#allocation6], 2048
    $region37: #{tpu_custom_call.1} parent=1 // pred_fallthru
      _
    // Predicated region
    $region38: #{tpu_custom_call.1} parent=1 // pred_check
      _
    $region39: #{tpu_custom_call.1} parent=1 // pred_check_branch
      %85 = sbr.rel (0) target = $region41
    $region40: #{tpu_custom_call.1} parent=1 // pred_region
      %86 = dma.done [#allocation9], 1024
    $region41: #{tpu_custom_call.1} parent=1 // pred_fallthru
      _
    // Predicated region
    $region42: #{tpu_custom_call.1} parent=1 // pred_check
      _
    $region43: #{tpu_custom_call.1} parent=1 // pred_check_branch
      %88 = sbr.rel (0) target = $region45
    $region44: #{tpu_custom_call.1} parent=1 // pred_region
      %89 = dma.done [#allocation9], 1024
    $region45: #{tpu_custom_call.1} parent=1 // pred_fallthru
      _
    %v91 = vld [vmem:[#allocation2] sm:$0xff]
    %v92 = vld [vmem:[#allocation2 + $0x8] sm:$0xff]
    %v93 = vld [vmem:[#allocation5] ss:$2 sm:$0x3]
    %v95 = vlaneseq
    %v96 = vshrl.u32 %v95, 7
    %v97 = vsub.s32 0, %v96
    %v98 = vrot.slane %v93, %v97
    %v99 = vlaneseq
    %v100 = vshrl.u32 %v99, 7
    %v101 = vsub.s32 1, %v100
    %v102 = vrot.slane %v93, %v101
    %v105 = vmul.f32 %v91, %v98
    %v106 = vmul.f32 %v92, %v102
    %s107 = scalar_lea.vmem [#allocation5], 1
    %v108 = vld [vmem:[%s107] ss:$2 sm:$0x3]
    %v110 = vlaneseq
    %v111 = vshrl.u32 %v110, 7
    %v112 = vsub.s32 0, %v111
    %v113 = vrot.slane %v108, %v112
    %v114 = vlaneseq
    %v115 = vshrl.u32 %v114, 7
    %v116 = vsub.s32 1, %v115
    %v117 = vrot.slane %v108, %v116
    %v120 = vadd.f32 %v105, %v113
    %v121 = vadd.f32 %v106, %v117
    %v122 = vmax.f32 %v120, %v121
    %123 = vmax.xlane.f32.xlu0 %v122
    %v124 = vpop.xlane.xlu0 %123
    %v125 = vsub.f32 %v120, %v124
    %v126 = vsub.f32 %v121, %v124
    %v127 = vmul.f32 %v125, 1.442695
    %v128 = vpow.pop %v127
    %v129 = vmul.f32 %v126, 1.442695
    %v130 = vpow.pop %v129
    %v131 = vadd.f32 %v128, %v130
    %132 = vadd.xlane.f32.xlu0 %v131
    %v133 = vpop.xlane.xlu0 %132
    %v134 = vlog2.pop %v133
    %v135 = vmul.f32 %v134, 0.6931472
    %v136 = vsub.f32 %v125, %v135
    %v137 = vsub.f32 %v126, %v135
    %138 = vst [vmem:[#allocation11] sm:$0xff] %v136
    %139 = vst [vmem:[#allocation11 + $0x8] sm:$0xff] %v137
    %v140 = vld [vmem:[%s5] sm:$0x1]
    %v141 = vld [vmem:[%s5 + $0x1] sm:$0x1]
    %v142 = vld [vmem:[%s5 + $0x2] sm:$0x1]
    %v143 = vpack.c.bf16 %v120, %v120
    %v144 = vpack.c.bf16 %v121, %v121
    %v145 = vld [vmem:[#allocation7] sm:$0xf]
    %v146 = vld [vmem:[#allocation7 + $0x4] sm:$0xf]
    %v147 = vld [vmem:[#allocation7 + $0x8] sm:$0xf]
    %v148 = vld [vmem:[#allocation7 + $0xc] sm:$0xf]
    %v149 = vld [vmem:[#allocation7 + $0x10] sm:$0xf]
    %v150 = vld [vmem:[#allocation7 + $0x14] sm:$0xf]
    %v151 = vld [vmem:[#allocation7 + $0x18] sm:$0xf]
    %v152 = vld [vmem:[#allocation7 + $0x1c] sm:$0xf]
    %v153 = vld [vmem:[#allocation7 + $0x20] sm:$0xf]
    %v154 = vld [vmem:[#allocation7 + $0x24] sm:$0xf]
    %v155 = vld [vmem:[#allocation7 + $0x28] sm:$0xf]
    %v156 = vld [vmem:[#allocation7 + $0x2c] sm:$0xf]
    %v157 = vld [vmem:[#allocation7 + $0x30] sm:$0xf]
    %v158 = vld [vmem:[#allocation7 + $0x34] sm:$0xf]
    %v159 = vld [vmem:[#allocation7 + $0x38] sm:$0xf]
    %v160 = vld [vmem:[#allocation7 + $0x3c] sm:$0xf]
    %v161 = vld [vmem:[#allocation7 + $0x40] sm:$0xf]
    %v162 = vld [vmem:[#allocation7 + $0x44] sm:$0xf]
    %v163 = vld [vmem:[#allocation7 + $0x48] sm:$0xf]
    %v164 = vld [vmem:[#allocation7 + $0x4c] sm:$0xf]
    %v165 = vld [vmem:[#allocation7 + $0x50] sm:$0xf]
    %v166 = vld [vmem:[#allocation7 + $0x54] sm:$0xf]
    %v167 = vld [vmem:[#allocation7 + $0x58] sm:$0xf]
    %v168 = vld [vmem:[#allocation7 + $0x5c] sm:$0xf]
    %v169 = vld [vmem:[#allocation7 + $0x60] sm:$0xf]
    %v170 = vld [vmem:[#allocation7 + $0x64] sm:$0xf]
    %v171 = vld [vmem:[#allocation7 + $0x68] sm:$0xf]
    %v172 = vld [vmem:[#allocation7 + $0x6c] sm:$0xf]
    %v173 = vld [vmem:[#allocation7 + $0x70] sm:$0xf]
    %v174 = vld [vmem:[#allocation7 + $0x74] sm:$0xf]
    %v175 = vld [vmem:[#allocation7 + $0x78] sm:$0xf]
    %v176 = vld [vmem:[#allocation7 + $0x7c] sm:$0xf]
    %v177 = vlaneseq
    %v178 = vshrl.u32 %v177, 7
    %v179 = vsub.s32 0, %v178
    %v180 = vrot.slane %v140, %v179
    %v213 = vunpack.c.l.b16 %v145
    %v214 = vunpack.c.l.b16 %v146
    %v215 = vunpack.c.l.b16 %v147
    %v216 = vunpack.c.l.b16 %v148
    %v217 = vunpack.c.l.b16 %v149
    %v218 = vunpack.c.l.b16 %v150
    %v219 = vunpack.c.l.b16 %v151
    %v220 = vunpack.c.l.b16 %v152
    %v221 = vunpack.c.l.b16 %v153
    %v222 = vunpack.c.l.b16 %v154
    %v223 = vunpack.c.l.b16 %v155
    %v224 = vunpack.c.l.b16 %v156
    %v225 = vunpack.c.l.b16 %v157
    %v226 = vunpack.c.l.b16 %v158
    %v227 = vunpack.c.l.b16 %v159
    %v228 = vunpack.c.l.b16 %v160
    %v229 = vunpack.c.l.b16 %v161
    %v230 = vunpack.c.l.b16 %v162
    %v231 = vunpack.c.l.b16 %v163
    %v232 = vunpack.c.l.b16 %v164
    %v233 = vunpack.c.l.b16 %v165
    %v234 = vunpack.c.l.b16 %v166
    %v235 = vunpack.c.l.b16 %v167
    %v236 = vunpack.c.l.b16 %v168
    %v237 = vunpack.c.l.b16 %v169
    %v238 = vunpack.c.l.b16 %v170
    %v239 = vunpack.c.l.b16 %v171
    %v240 = vunpack.c.l.b16 %v172
    %v241 = vunpack.c.l.b16 %v173
    %v242 = vunpack.c.l.b16 %v174
    %v243 = vunpack.c.l.b16 %v175
    %v244 = vunpack.c.l.b16 %v176
    %v245 = vpack.c.b16 %v214, %v213
    %v246 = vpack.c.b16 %v216, %v215
    %v247 = vpack.c.b16 %v218, %v217
    %v248 = vpack.c.b16 %v220, %v219
    %v249 = vpack.c.b16 %v222, %v221
    %v250 = vpack.c.b16 %v224, %v223
    %v251 = vpack.c.b16 %v226, %v225
    %v252 = vpack.c.b16 %v228, %v227
    %v253 = vpack.c.b16 %v230, %v229
    %v254 = vpack.c.b16 %v232, %v231
    %v255 = vpack.c.b16 %v234, %v233
    %v256 = vpack.c.b16 %v236, %v235
    %v257 = vpack.c.b16 %v238, %v237
    %v258 = vpack.c.b16 %v240, %v239
    %v259 = vpack.c.b16 %v242, %v241
    %v260 = vpack.c.b16 %v244, %v243
    %277 = vmatprep.subr.bf16.mxu0 0
    %278 = vmatpush1.bf16.msra.mxu0 %v252
    %279 = vmatprep.subr.bf16.mxu0 0
    %280 = vmatpush1.bf16.msra.mxu0 %v251
    %281 = vmatprep.subr.bf16.mxu0 0
    %282 = vmatpush1.bf16.msra.mxu0 %v250
    %283 = vmatprep.subr.bf16.mxu0 0
    %284 = vmatpush1.bf16.msra.mxu0 %v249
    %285 = vmatprep.subr.bf16.mxu0 0
    %286 = vmatpush1.bf16.msra.mxu0 %v248
    %287 = vmatprep.subr.bf16.mxu0 0
    %288 = vmatpush1.bf16.msra.mxu0 %v247
    %289 = vmatprep.subr.bf16.mxu0 0
    %290 = vmatpush1.bf16.msra.mxu0 %v246
    %291 = vmatprep.subr.bf16.mxu0 0
    %292 = vmatpush1.bf16.msra.mxu0 %v245
    %293 = vmatprep.subr.bf16.mxu0 0
    %294 = vmatpush2.bf16.msra.mxu0 %v260
    %295 = vmatprep.subr.bf16.mxu0 0
    %296 = vmatpush2.bf16.msra.mxu0 %v259
    %297 = vmatprep.subr.bf16.mxu0 0
    %298 = vmatpush2.bf16.msra.mxu0 %v258
    %299 = vmatprep.subr.bf16.mxu0 0
    %300 = vmatpush2.bf16.msra.mxu0 %v257
    %301 = vmatprep.subr.bf16.mxu0 0
    %302 = vmatpush2.bf16.msra.mxu0 %v256
    %303 = vmatprep.subr.bf16.mxu0 0
    %304 = vmatpush2.bf16.msra.mxu0 %v255
    %305 = vmatprep.subr.bf16.mxu0 0
    %306 = vmatpush2.bf16.msra.mxu0 %v254
    %307 = vmatprep.subr.bf16.mxu0 0
    %308 = vmatpush2.bf16.msra.mxu0 %v253
    %309 = vmatprep.mubr.bf16.mxu0 %v144
    %310 = vmatmul.mubr.bf16.gmra.mxu0 %v143
    %v311 = vpop.f32.mrf.mxu0
    %v312 = vadd.f32 %v180, %v311
    %v313 = vpop.f32.mrf.mxu0
    %v314 = vpop.f32.mrf.mxu0
    %v315 = vpop.f32.mrf.mxu0
    %316 = vdwg.mxu0
    %vm317 = vcmp.gt.f32.partialorder %v312, 0.0
    %v318 = vmul.f32 %v312, 0.01
    %v319 = vsel %vm317, %v312, %v318
    %v320 = vpack.c.bf16 %v319, %v319
    %v321 = vld [vmem:[#allocation8] sm:$0xf]
    %v322 = vld [vmem:[#allocation8 + $0x4] sm:$0xf]
    %v323 = vld [vmem:[#allocation8 + $0x8] sm:$0xf]
    %v324 = vld [vmem:[#allocation8 + $0xc] sm:$0xf]
    %v325 = vld [vmem:[#allocation8 + $0x10] sm:$0xf]
    %v326 = vld [vmem:[#allocation8 + $0x14] sm:$0xf]
    %v327 = vld [vmem:[#allocation8 + $0x18] sm:$0xf]
    %v328 = vld [vmem:[#allocation8 + $0x1c] sm:$0xf]
    %v329 = vld [vmem:[#allocation8 + $0x20] sm:$0xf]
    %v330 = vld [vmem:[#allocation8 + $0x24] sm:$0xf]
    %v331 = vld [vmem:[#allocation8 + $0x28] sm:$0xf]
    %v332 = vld [vmem:[#allocation8 + $0x2c] sm:$0xf]
    %v333 = vld [vmem:[#allocation8 + $0x30] sm:$0xf]
    %v334 = vld [vmem:[#allocation8 + $0x34] sm:$0xf]
    %v335 = vld [vmem:[#allocation8 + $0x38] sm:$0xf]
    %v336 = vld [vmem:[#allocation8 + $0x3c] sm:$0xf]
    %v337 = vlaneseq
    %v338 = vshrl.u32 %v337, 7
    %v339 = vsub.s32 0, %v338
    %v340 = vrot.slane %v141, %v339
    %v357 = vunpack.c.l.b16 %v321
    %v358 = vunpack.c.l.b16 %v322
    %v359 = vunpack.c.l.b16 %v323
    %v360 = vunpack.c.l.b16 %v324
    %v361 = vunpack.c.l.b16 %v325
    %v362 = vunpack.c.l.b16 %v326
    %v363 = vunpack.c.l.b16 %v327
    %v364 = vunpack.c.l.b16 %v328
    %v365 = vunpack.c.l.b16 %v329
    %v366 = vunpack.c.l.b16 %v330
    %v367 = vunpack.c.l.b16 %v331
    %v368 = vunpack.c.l.b16 %v332
    %v369 = vunpack.c.l.b16 %v333
    %v370 = vunpack.c.l.b16 %v334
    %v371 = vunpack.c.l.b16 %v335
    %v372 = vunpack.c.l.b16 %v336
    %v373 = vpack.c.b16 %v358, %v357
    %v374 = vpack.c.b16 %v360, %v359
    %v375 = vpack.c.b16 %v362, %v361
    %v376 = vpack.c.b16 %v364, %v363
    %v377 = vpack.c.b16 %v366, %v365
    %v378 = vpack.c.b16 %v368, %v367
    %v379 = vpack.c.b16 %v370, %v369
    %v380 = vpack.c.b16 %v372, %v371
    %389 = vmatprep.subr.bf16.mxu0 0
    %390 = vmatpush1.bf16.msra.mxu0 %v380
    %391 = vmatprep.subr.bf16.mxu0 0
    %392 = vmatpush1.bf16.msra.mxu0 %v379
    %393 = vmatprep.subr.bf16.mxu0 0
    %394 = vmatpush1.bf16.msra.mxu0 %v378
    %395 = vmatprep.subr.bf16.mxu0 0
    %396 = vmatpush1.bf16.msra.mxu0 %v377
    %397 = vmatprep.subr.bf16.mxu0 0
    %398 = vmatpush1.bf16.msra.mxu0 %v376
    %399 = vmatprep.subr.bf16.mxu0 0
    %400 = vmatpush1.bf16.msra.mxu0 %v375
    %401 = vmatprep.subr.bf16.mxu0 0
    %402 = vmatpush1.bf16.msra.mxu0 %v374
    %403 = vmatprep.subr.bf16.mxu0 0
    %404 = vmatpush1.bf16.msra.mxu0 %v373
    %405 = vmatprep.subr.bf16.mxu0 0
    %406 = vmatpush2.bf16.msra.mxu0 0
    %407 = vmatprep.subr.bf16.mxu0 0
    %408 = vmatpush2.bf16.msra.mxu0 0
    %409 = vmatprep.subr.bf16.mxu0 0
    %410 = vmatpush2.bf16.msra.mxu0 0
    %411 = vmatprep.subr.bf16.mxu0 0
    %412 = vmatpush2.bf16.msra.mxu0 0
    %413 = vmatprep.subr.bf16.mxu0 0
    %414 = vmatpush2.bf16.msra.mxu0 0
    %415 = vmatprep.subr.bf16.mxu0 0
    %416 = vmatpush2.bf16.msra.mxu0 0
    %417 = vmatprep.subr.bf16.mxu0 0
    %418 = vmatpush2.bf16.msra.mxu0 0
    %419 = vmatprep.subr.bf16.mxu0 0
    %420 = vmatpush2.bf16.msra.mxu0 0
    %421 = vmatprep.mubr.bf16.mxu0 0
    %422 = vmatmul.mubr.bf16.gmra.mxu0 %v320
    %v423 = vpop.f32.mrf.mxu0
    %v424 = vadd.f32 %v340, %v423
    %v425 = vpop.f32.mrf.mxu0
    %v426 = vpop.f32.mrf.mxu0
    %v427 = vpop.f32.mrf.mxu0
    %428 = vdwg.mxu0
    %vm429 = vcmp.gt.f32.partialorder %v424, 0.0
    %v430 = vmul.f32 %v424, 0.01
    %v431 = vsel %vm429, %v424, %v430
    %v432 = vpack.c.bf16 %v431, %v431
    %v433 = vld [vmem:[#allocation10] sm:$0xf]
    %v434 = vld [vmem:[#allocation10 + $0x4] sm:$0xf]
    %v435 = vld [vmem:[#allocation10 + $0x8] sm:$0xf]
    %v436 = vld [vmem:[#allocation10 + $0xc] sm:$0xf]
    %v437 = vld [vmem:[#allocation10 + $0x10] sm:$0xf]
    %v438 = vld [vmem:[#allocation10 + $0x14] sm:$0xf]
    %v439 = vld [vmem:[#allocation10 + $0x18] sm:$0xf]
    %v440 = vld [vmem:[#allocation10 + $0x1c] sm:$0xf]
    %v441 = vld [vmem:[#allocation10 + $0x20] sm:$0xf]
    %v442 = vld [vmem:[#allocation10 + $0x24] sm:$0xf]
    %v443 = vld [vmem:[#allocation10 + $0x28] sm:$0xf]
    %v444 = vld [vmem:[#allocation10 + $0x2c] sm:$0xf]
    %v445 = vld [vmem:[#allocation10 + $0x30] sm:$0xf]
    %v446 = vld [vmem:[#allocation10 + $0x34] sm:$0xf]
    %v447 = vld [vmem:[#allocation10 + $0x38] sm:$0xf]
    %v448 = vld [vmem:[#allocation10 + $0x3c] sm:$0xf]
    %v449 = vlaneseq
    %v450 = vshrl.u32 %v449, 7
    %v451 = vsub.s32 0, %v450
    %v452 = vrot.slane %v142, %v451
    %v469 = vunpack.c.l.b16 %v433
    %v470 = vunpack.c.l.b16 %v434
    %v471 = vunpack.c.l.b16 %v435
    %v472 = vunpack.c.l.b16 %v436
    %v473 = vunpack.c.l.b16 %v437
    %v474 = vunpack.c.l.b16 %v438
    %v475 = vunpack.c.l.b16 %v439
    %v476 = vunpack.c.l.b16 %v440
    %v477 = vunpack.c.l.b16 %v441
    %v478 = vunpack.c.l.b16 %v442
    %v479 = vunpack.c.l.b16 %v443
    %v480 = vunpack.c.l.b16 %v444
    %v481 = vunpack.c.l.b16 %v445
    %v482 = vunpack.c.l.b16 %v446
    %v483 = vunpack.c.l.b16 %v447
    %v484 = vunpack.c.l.b16 %v448
    %v485 = vpack.c.b16 %v470, %v469
    %v486 = vpack.c.b16 %v472, %v471
    %v487 = vpack.c.b16 %v474, %v473
    %v488 = vpack.c.b16 %v476, %v475
    %v489 = vpack.c.b16 %v478, %v477
    %v490 = vpack.c.b16 %v480, %v479
    %v491 = vpack.c.b16 %v482, %v481
    %v492 = vpack.c.b16 %v484, %v483
    %501 = vmatprep.subr.bf16.mxu0 0
    %502 = vmatpush1.bf16.msra.mxu0 %v492
    %503 = vmatprep.subr.bf16.mxu0 0
    %504 = vmatpush1.bf16.msra.mxu0 %v491
    %505 = vmatprep.subr.bf16.mxu0 0
    %506 = vmatpush1.bf16.msra.mxu0 %v490
    %507 = vmatprep.subr.bf16.mxu0 0
    %508 = vmatpush1.bf16.msra.mxu0 %v489
    %509 = vmatprep.subr.bf16.mxu0 0
    %510 = vmatpush1.bf16.msra.mxu0 %v488
    %511 = vmatprep.subr.bf16.mxu0 0
    %512 = vmatpush1.bf16.msra.mxu0 %v487
    %513 = vmatprep.subr.bf16.mxu0 0
    %514 = vmatpush1.bf16.msra.mxu0 %v486
    %515 = vmatprep.subr.bf16.mxu0 0
    %516 = vmatpush1.bf16.msra.mxu0 %v485
    %517 = vmatprep.subr.bf16.mxu0 0
    %518 = vmatpush2.bf16.msra.mxu0 0
    %519 = vmatprep.subr.bf16.mxu0 0
    %520 = vmatpush2.bf16.msra.mxu0 0
    %521 = vmatprep.subr.bf16.mxu0 0
    %522 = vmatpush2.bf16.msra.mxu0 0
    %523 = vmatprep.subr.bf16.mxu0 0
    %524 = vmatpush2.bf16.msra.mxu0 0
    %525 = vmatprep.subr.bf16.mxu0 0
    %526 = vmatpush2.bf16.msra.mxu0 0
    %527 = vmatprep.subr.bf16.mxu0 0
    %528 = vmatpush2.bf16.msra.mxu0 0
    %529 = vmatprep.subr.bf16.mxu0 0
    %530 = vmatpush2.bf16.msra.mxu0 0
    %531 = vmatprep.subr.bf16.mxu0 0
    %532 = vmatpush2.bf16.msra.mxu0 0
    %533 = vmatprep.mubr.bf16.mxu0 0
    %534 = vmatmul.mubr.bf16.gmra.mxu0 %v432
    %v535 = vpop.f32.mrf.mxu0
    %v536 = vadd.f32 %v452, %v535
    %v537 = vpop.f32.mrf.mxu0
    %v538 = vpop.f32.mrf.mxu0
    %v539 = vpop.f32.mrf.mxu0
    %540 = vdwg.mxu0
    %vm541 = vcmask 15360
    %542 = vst.msk [vmem:[%s7] sm:$0xff] %vm541, %v536
    // Predicated region
    $region46: #{tpu_custom_call.1} parent=1 // pred_check
      _
    $region47: #{tpu_custom_call.1} parent=1 // pred_check_branch
      %544 = sbr.rel (0) target = $region49
    $region48: #{tpu_custom_call.1} parent=1 // pred_region
      %s546 = ssub.s32 256, 256
      %547 = vsyncadd [#allocation4], %s546
      %s549 = sshll.u32 [#allocation11], 4
      %s550 = int_to_ptr.vmem [resolvable:$true] %s549
      %552 = dma.vmem_to_hbm [thread:$0]  %s550, 256, %s6, [#allocation4]
    $region49: #{tpu_custom_call.1} parent=1 // pred_fallthru
      _
    // Predicated region
    $region50: #{tpu_custom_call.1} parent=1 // pred_check
      _
    $region51: #{tpu_custom_call.1} parent=1 // pred_check_branch
      %554 = sbr.rel (0) target = $region53
    $region52: #{tpu_custom_call.1} parent=1 // pred_region
      _
    $region53: #{tpu_custom_call.1} parent=1 // pred_fallthru
      _
    // Predicated region
    $region54: #{tpu_custom_call.1} parent=1 // pred_check
      _
    $region55: #{tpu_custom_call.1} parent=1 // pred_check_branch
      %556 = sbr.rel (0) target = $region57
    $region56: #{tpu_custom_call.1} parent=1 // pred_region
      %557 = dma.done [#allocation4], 256
    $region57: #{tpu_custom_call.1} parent=1 // pred_fallthru
      _
    // Predicated region
    $region58: #{tpu_custom_call.1} parent=1 // pred_check
      _
    $region59: #{tpu_custom_call.1} parent=1 // pred_check_branch
      %559 = sbr.rel (0) target = $region61
    $region60: #{tpu_custom_call.1} parent=1 // pred_region
      _
    $region61: #{tpu_custom_call.1} parent=1 // pred_fallthru
      _
    %560 = vsyncpa [#allocation3], 1
    %561 = vsyncpa [#allocation6], 1
    %562 = vsyncpa [#allocation9], 1
    %563 = vsyncpa [#allocation4], 1

</llo_original>
